<compile_context>
chip_gen: v7x
topology: tpu7x:2x2x1
jax: 0.10.0
libtpu: 0.0.40
codegen_flags: <defaults>
</compile_context>

<pallas_src>
import jax
import jax.numpy as jnp
from jax.experimental import pallas as pl
from jax.experimental.pallas import tpu as pltpu

_BIG = 100000.0


def xtoy_kernel(x_ref, mask_ref, w_ref, b_ref, o_ref):
    # x_ref: (TB, n, dx)   mask_ref: (TB, n, 1)   w_ref: (4, dx, dy)
    # b_ref: (1, dy)       o_ref:    (TB, dy)
    x = x_ref[...].astype(jnp.float32)               # (TB, n, dx)
    mask = mask_ref[...].astype(jnp.float32)         # (TB, n, 1) -> lane splat over dx

    denom = jnp.sum(mask, axis=1)                    # (TB, 1) valid-node count
    inv_denom = pl.reciprocal(denom)                 # exact; shared by m and std

    big = _BIG * (1.0 - mask)                        # (TB, n, 1), torch's 1e5 * imask

    # Single pass over the block: three sums + masked min/max.
    xm = x * mask                                    # masked x (lane-broadcast mul)
    s0 = jnp.sum(x, axis=1)                          # (TB, dx) unmasked sum (torch parity)
    s1 = jnp.sum(xm, axis=1)                         # (TB, dx)
    s2 = jnp.sum(xm * x, axis=1)                     # (TB, dx)
    mi = jnp.min(x + big, axis=1)                    # (TB, dx)
    ma = jnp.max(x - big, axis=1)                    # (TB, dx)

    m = s0 * inv_denom                               # (TB, dx)
    # sum(mask*(x-m)^2)/denom == (s2 - 2*m*s1 + m^2*denom)/denom
    std = (s2 - 2.0 * m * s1) * inv_denom + m * m    # (TB, dx)

    # out = [m | mi | ma | std] @ W^T + b without a lane-level concatenate.
    acc = jnp.dot(m, w_ref[0], preferred_element_type=jnp.float32)
    acc = acc + jnp.dot(mi, w_ref[1], preferred_element_type=jnp.float32)
    acc = acc + jnp.dot(ma, w_ref[2], preferred_element_type=jnp.float32)
    acc = acc + jnp.dot(std, w_ref[3], preferred_element_type=jnp.float32)
    o_ref[...] = (acc + b_ref[...]).astype(o_ref.dtype)


def _vmem_capacity_bytes():
    """Physical VMEM of the local TPU; conservative fallback if unavailable."""
    try:
        return int(pltpu.get_tpu_info().vmem_capacity_bytes)
    except Exception:
        return 64 << 20                               # assume the smallest (v7x per-TC)


def _budgets():
    """(X-block byte target, scoped-VMEM limit) sized per TPU generation."""
    vmem = _vmem_capacity_bytes()
    if vmem >= (100 << 20):                           # v5e / v6e: 128 MiB VMEM, HBM-bound
        return 6 << 20, 64 << 20
    return 2 << 20, 32 << 20                          # v7x: 64 MiB per TC, temp-aware


def _pick_block_b(bs, n, dx, itemsize, target_bytes, min_steps=8):
    """Batch tile: multiple of 8 sublanes, fits the VMEM byte target, and keeps
    >= ~min_steps grid steps when bs allows (>= min_steps/2 per TC on v7x
    megacore) so DMA double-buffering is never exposed."""
    if bs <= 8:
        return bs                                     # single full-batch block
    bytes_per_row = max(n * dx * itemsize, 1)
    tb = target_bytes // bytes_per_row                # VMEM byte-budget cap
    tb = min(tb, max(bs // min_steps, 8))             # keep enough grid steps
    tb = max(8, (tb // 8) * 8)                        # sublane multiple -> dense stores
    return min(tb, bs)


def xtoy_forward(X, x_mask, weight, bias, *, block_b=None):
    """X: (bs, n, dx); x_mask: (bs, n, 1) bool/float; weight: (dy, 4*dx); bias: (dy,)."""
    bs, n, dx = X.shape
    dy = weight.shape[0]

    block_target, vmem_limit = _budgets()
    if block_b is None:
        block_b = _pick_block_b(bs, n, dx, X.dtype.itemsize, block_target)

    # Tiny glue: per-node mask kept (bs, n, 1) (no dx expansion), weight as four
    # lane-aligned (dx, dy) slabs, bias as a row.
    mask3d = x_mask.reshape(bs, n, 1).astype(jnp.float32)
    w4 = weight.T.astype(jnp.float32).reshape(4, dx, dy)   # slabs for m, mi, ma, std
    b2 = bias.reshape(1, dy).astype(jnp.float32)

    # Pad batch to a multiple of block_b; padded rows get an all-ones mask so
    # everything stays finite (they are sliced away below).
    grid_b = pl.cdiv(bs, block_b)
    pb = grid_b * block_b
    if pb != bs:
        X = jnp.pad(X, ((0, pb - bs), (0, 0), (0, 0)))
        mask3d = jnp.pad(mask3d, ((0, pb - bs), (0, 0), (0, 0)), constant_values=1.0)

    cost = pl.CostEstimate(
        flops=int(2 * pb * (4 * dx) * dy + 10 * pb * n * dx),
        transcendentals=0,
        bytes_accessed=int(pb * n * dx * X.dtype.itemsize      # X
                           + pb * n * 4                        # mask
                           + 4 * dx * dy * 4 + dy * 4          # weight + bias
                           + pb * dy * 4),                     # out
    )

    out = pl.pallas_call(
        xtoy_kernel,
        out_shape=jax.ShapeDtypeStruct((pb, dy), jnp.float32),
        grid_spec=pltpu.PrefetchScalarGridSpec(
            num_scalar_prefetch=0,
            grid=(grid_b,),
            in_specs=[
                pl.BlockSpec((block_b, n, dx), lambda b: (b, 0, 0)),
                pl.BlockSpec((block_b, n, 1), lambda b: (b, 0, 0)),
                pl.BlockSpec((4, dx, dy), lambda b: (0, 0, 0)),   # resident, not re-fetched
                pl.BlockSpec((1, dy), lambda b: (0, 0)),          # resident
            ],
            out_specs=pl.BlockSpec((block_b, dy), lambda b: (b, 0)),
        ),
        compiler_params=pltpu.CompilerParams(
            dimension_semantics=("parallel",),
            vmem_limit_bytes=vmem_limit,
        ),
        cost_estimate=cost,
    )(X, mask3d, w4, b2)

    return out[:bs] if pb != bs else out


def xtoy_reference(X, x_mask, weight, bias):
    """Pure-JAX reference mirroring the PyTorch module exactly."""
    bs, n, dx = X.shape
    mask = jnp.broadcast_to(x_mask, (bs, n, dx)).astype(jnp.float32)
    imask = 1.0 - mask
    denom = jnp.sum(mask, axis=1)
    m = jnp.sum(X, axis=1) / denom
    mi = jnp.min(X + 100000.0 * imask, axis=1)
    ma = jnp.max(X - 100000.0 * imask, axis=1)
    std = jnp.sum((X - m[:, None, :]) ** 2 * mask, axis=1) / denom
    z = jnp.concatenate([m, mi, ma, std], axis=-1)
    return z @ weight.T + bias


def _make_case(key, bs, n, dx, dy):
    kx, kl, kw, kb = jax.random.split(key, 4)
    X = jax.random.normal(kx, (bs, n, dx), dtype=jnp.float32)
    lengths = jax.random.randint(kl, (bs,), 1, n + 1)                 # >=1 valid node
    x_mask = (jnp.arange(n)[None, :] < lengths[:, None])[..., None]   # (bs, n, 1) bool
    fan_in = 4 * dx
    bound = 1.0 / (fan_in ** 0.5)
    weight = jax.random.uniform(kw, (dy, fan_in), minval=-bound, maxval=bound,
                                dtype=jnp.float32)
    bias = jax.random.uniform(kb, (dy,), minval=-bound, maxval=bound,
                              dtype=jnp.float32)
    return X, x_mask, weight, bias


if __name__ == "__main__":
    key = jax.random.PRNGKey(0)
    k1, k2 = jax.random.split(key)

    # Case 1: tiny batch (grid of 1 full-batch block).
    bs, n, dx, dy = 2, 8, 32, 32
    X, x_mask, weight, bias = _make_case(k1, bs, n, dx, dy)
    out = jax.block_until_ready(xtoy_forward(X, x_mask, weight, bias))
    ref = xtoy_reference(X, x_mask, weight, bias)
    assert out.shape == (bs, dy)
    assert jnp.allclose(out, ref, atol=1e-4, rtol=1e-4), "mismatch vs reference (case 1)"

    # Case 2: batch tiling + padding path (bs=20 -> TB=8, 3 grid steps, 4 pad rows).
    bs2 = 20
    X2, x_mask2, weight2, bias2 = _make_case(k2, bs2, n, dx, dy)
    out2 = jax.block_until_ready(xtoy_forward(X2, x_mask2, weight2, bias2))
    ref2 = xtoy_reference(X2, x_mask2, weight2, bias2)
    assert out2.shape == (bs2, dy)
    assert jnp.allclose(out2, ref2, atol=1e-4, rtol=1e-4), "mismatch vs reference (case 2)"

    print("KERNEL_OK")
</pallas_src>

<mosaic_0001>
module attributes {stable_mosaic.version = 11 : i64} {
  func.func @xtoy_kernel(%arg0: i32, %arg1: memref<2x8x32xf32, #tpu.memory_space<vmem>>, %arg2: memref<2x8x1xf32, #tpu.memory_space<vmem>>, %arg3: memref<4x32x32xf32, #tpu.memory_space<vmem>>, %arg4: memref<1x32xf32, #tpu.memory_space<vmem>>, %arg5: memref<2x32xf32, #tpu.memory_space<vmem>>) attributes {dimension_semantics = [#tpu.dimension_semantics<parallel>], iteration_bounds = array<i64: 1>, scalar_prefetch = 0 : i64, scratch_operands = 0 : i64, tpu.core_type = #tpu.core_type<tc>, window_params = [{transform_indices = @transform_0, window_bounds = array<i64: 2, 8, 32>}, {transform_indices = @transform_1, window_bounds = array<i64: 2, 8, 1>}, {pipeline_mode = #tpu.pipeline_mode<synchronous>, transform_indices = @transform_2, window_bounds = array<i64: 4, 32, 32>}, {pipeline_mode = #tpu.pipeline_mode<synchronous>, transform_indices = @transform_3, window_bounds = array<i64: 1, 32>}, {transform_indices = @transform_4, window_bounds = array<i64: 2, 32>}]} {
    %c0 = arith.constant 0 : index
    %c0_0 = arith.constant 0 : index
    %c0_1 = arith.constant 0 : index
    %0 = vector.load %arg1[%c0, %c0_0, %c0_1] : memref<2x8x32xf32, #tpu.memory_space<vmem>>, vector<2x8x32xf32>
    %c0_2 = arith.constant 0 : index
    %c0_3 = arith.constant 0 : index
    %c0_4 = arith.constant 0 : index
    %1 = vector.load %arg2[%c0_2, %c0_3, %c0_4] : memref<2x8x1xf32, #tpu.memory_space<vmem>>, vector<2x8x1xf32>
    %cst = arith.constant dense<0.000000e+00> : vector<2x1xf32>
    %2 = vector.multi_reduction <add>, %1, %cst [1] : vector<2x8x1xf32> to vector<2x1xf32>
    %3 = tpu.reciprocal %2 : vector<2x1xf32> -> vector<2x1xf32>
    %cst_5 = arith.constant 1.000000e+00 : f32
    %4 = vector.broadcast %cst_5 : f32 to vector<2x8x1xf32>
    %5 = arith.subf %4, %1 : vector<2x8x1xf32>
    %cst_6 = arith.constant 1.000000e+05 : f32
    %6 = vector.broadcast %cst_6 : f32 to vector<2x8x1xf32>
    %7 = arith.mulf %6, %5 : vector<2x8x1xf32>
    %8 = vector.broadcast %1 : vector<2x8x1xf32> to vector<2x8x32xf32>
    %9 = arith.mulf %0, %8 : vector<2x8x32xf32>
    %cst_7 = arith.constant dense<0.000000e+00> : vector<2x32xf32>
    %10 = vector.multi_reduction <add>, %0, %cst_7 [1] : vector<2x8x32xf32> to vector<2x32xf32>
    %cst_8 = arith.constant dense<0.000000e+00> : vector<2x32xf32>
    %11 = vector.multi_reduction <add>, %9, %cst_8 [1] : vector<2x8x32xf32> to vector<2x32xf32>
    %12 = arith.mulf %9, %0 : vector<2x8x32xf32>
    %cst_9 = arith.constant dense<0.000000e+00> : vector<2x32xf32>
    %13 = vector.multi_reduction <add>, %12, %cst_9 [1] : vector<2x8x32xf32> to vector<2x32xf32>
    %14 = vector.broadcast %7 : vector<2x8x1xf32> to vector<2x8x32xf32>
    %15 = arith.addf %0, %14 : vector<2x8x32xf32>
    %cst_10 = arith.constant dense<0x7F800000> : vector<2x32xf32>
    %16 = vector.multi_reduction <minimumf>, %15, %cst_10 [1] : vector<2x8x32xf32> to vector<2x32xf32>
    %17 = vector.broadcast %7 : vector<2x8x1xf32> to vector<2x8x32xf32>
    %18 = arith.subf %0, %17 : vector<2x8x32xf32>
    %cst_11 = arith.constant dense<0xFF800000> : vector<2x32xf32>
    %19 = vector.multi_reduction <maximumf>, %18, %cst_11 [1] : vector<2x8x32xf32> to vector<2x32xf32>
    %20 = vector.broadcast %3 : vector<2x1xf32> to vector<2x32xf32>
    %21 = arith.mulf %10, %20 : vector<2x32xf32>
    %cst_12 = arith.constant 2.000000e+00 : f32
    %22 = vector.broadcast %cst_12 : f32 to vector<2x32xf32>
    %23 = arith.mulf %22, %21 : vector<2x32xf32>
    %24 = arith.mulf %23, %11 : vector<2x32xf32>
    %25 = arith.subf %13, %24 : vector<2x32xf32>
    %26 = vector.broadcast %3 : vector<2x1xf32> to vector<2x32xf32>
    %27 = arith.mulf %25, %26 : vector<2x32xf32>
    %28 = arith.mulf %21, %21 : vector<2x32xf32>
    %29 = arith.addf %27, %28 : vector<2x32xf32>
    %c0_13 = arith.constant 0 : index
    %c0_14 = arith.constant 0 : index
    %c0_15 = arith.constant 0 : index
    %30 = vector.load %arg3[%c0_13, %c0_14, %c0_15] : memref<4x32x32xf32, #tpu.memory_space<vmem>>, vector<1x32x32xf32>
    %31 = vector.shape_cast %30 : vector<1x32x32xf32> to vector<32x32xf32>
    %cst_16 = arith.constant dense<0.000000e+00> : vector<2x32xf32>
    %32 = tpu.matmul %21, %31, %cst_16 {dimension_numbers = #tpu.dot_dimension_numbers<[1], [0], [0], [1], [0, 0, 1, 1], [], []>} : vector<2x32xf32>, vector<32x32xf32>, vector<2x32xf32> -> vector<2x32xf32>
    %c1 = arith.constant 1 : index
    %c0_17 = arith.constant 0 : index
    %c0_18 = arith.constant 0 : index
    %33 = vector.load %arg3[%c1, %c0_17, %c0_18] : memref<4x32x32xf32, #tpu.memory_space<vmem>>, vector<1x32x32xf32>
    %34 = vector.shape_cast %33 : vector<1x32x32xf32> to vector<32x32xf32>
    %cst_19 = arith.constant dense<0.000000e+00> : vector<2x32xf32>
    %35 = tpu.matmul %16, %34, %cst_19 {dimension_numbers = #tpu.dot_dimension_numbers<[1], [0], [0], [1], [0, 0, 1, 1], [], []>} : vector<2x32xf32>, vector<32x32xf32>, vector<2x32xf32> -> vector<2x32xf32>
    %36 = arith.addf %32, %35 : vector<2x32xf32>
    %c2 = arith.constant 2 : index
    %c0_20 = arith.constant 0 : index
    %c0_21 = arith.constant 0 : index
    %37 = vector.load %arg3[%c2, %c0_20, %c0_21] : memref<4x32x32xf32, #tpu.memory_space<vmem>>, vector<1x32x32xf32>
    %38 = vector.shape_cast %37 : vector<1x32x32xf32> to vector<32x32xf32>
    %cst_22 = arith.constant dense<0.000000e+00> : vector<2x32xf32>
    %39 = tpu.matmul %19, %38, %cst_22 {dimension_numbers = #tpu.dot_dimension_numbers<[1], [0], [0], [1], [0, 0, 1, 1], [], []>} : vector<2x32xf32>, vector<32x32xf32>, vector<2x32xf32> -> vector<2x32xf32>
    %40 = arith.addf %36, %39 : vector<2x32xf32>
    %c3 = arith.constant 3 : index
    %c0_23 = arith.constant 0 : index
    %c0_24 = arith.constant 0 : index
    %41 = vector.load %arg3[%c3, %c0_23, %c0_24] : memref<4x32x32xf32, #tpu.memory_space<vmem>>, vector<1x32x32xf32>
    %42 = vector.shape_cast %41 : vector<1x32x32xf32> to vector<32x32xf32>
    %cst_25 = arith.constant dense<0.000000e+00> : vector<2x32xf32>
    %43 = tpu.matmul %29, %42, %cst_25 {dimension_numbers = #tpu.dot_dimension_numbers<[1], [0], [0], [1], [0, 0, 1, 1], [], []>} : vector<2x32xf32>, vector<32x32xf32>, vector<2x32xf32> -> vector<2x32xf32>
    %44 = arith.addf %40, %43 : vector<2x32xf32>
    %c0_26 = arith.constant 0 : index
    %c0_27 = arith.constant 0 : index
    %45 = vector.load %arg4[%c0_26, %c0_27] : memref<1x32xf32, #tpu.memory_space<vmem>>, vector<1x32xf32>
    %46 = vector.broadcast %45 : vector<1x32xf32> to vector<2x32xf32>
    %47 = arith.addf %44, %46 : vector<2x32xf32>
    %c0_28 = arith.constant 0 : index
    %c0_29 = arith.constant 0 : index
    %48 = vector.load %arg5[%c0_28, %c0_29] : memref<2x32xf32, #tpu.memory_space<vmem>>, vector<2x32xf32>
    tpu.vector_store %arg5[%c0_28, %c0_29], %47 {strides = array<i32>} : memref<2x32xf32, #tpu.memory_space<vmem>>, vector<2x32xf32>,
    return
  }
  func.func @transform_0(%arg0: i32) -> (i32, i32, i32) {
    %c0_i32 = arith.constant 0 : i32
    %c0_i32_0 = arith.constant 0 : i32
    %c0_i32_1 = arith.constant 0 : i32
    return %arg0, %c0_i32, %c0_i32_0 : i32, i32, i32
  }
  func.func @transform_1(%arg0: i32) -> (i32, i32, i32) {
    %c0_i32 = arith.constant 0 : i32
    %c0_i32_0 = arith.constant 0 : i32
    %c0_i32_1 = arith.constant 0 : i32
    return %arg0, %c0_i32, %c0_i32_0 : i32, i32, i32
  }
  func.func @transform_2(%arg0: i32) -> (i32, i32, i32) {
    %c0_i32 = arith.constant 0 : i32
    %c0_i32_0 = arith.constant 0 : i32
    %c0_i32_1 = arith.constant 0 : i32
    %c0_i32_2 = arith.constant 0 : i32
    return %c0_i32, %c0_i32_0, %c0_i32_1 : i32, i32, i32
  }
  func.func @transform_3(%arg0: i32) -> (i32, i32) {
    %c0_i32 = arith.constant 0 : i32
    %c0_i32_0 = arith.constant 0 : i32
    %c0_i32_1 = arith.constant 0 : i32
    return %c0_i32, %c0_i32_0 : i32, i32
  }
  func.func @transform_4(%arg0: i32) -> (i32, i32) {
    %c0_i32 = arith.constant 0 : i32
    %c0_i32_0 = arith.constant 0 : i32
    return %arg0, %c0_i32 : i32, i32
  }
}

</mosaic_0001>

<llo_original>
// kernel: tpu_custom_call.1
$region0: #{tpu_custom_call.1}
  #allocation0 [shape = 'u32[]', space=smem, size = 0x4, offset = 0x4, fixed_abs, tag = 'smem constant byte address 0x4 - core index']
  #allocation1 [shape = 'u32[144,128]{1,0:T(1,128)}', space=vmem, size = 0x12000, scoped, tag = 'internal scratch']
  %s0 = inlined_call_operand.vmem [shape: f32[2,8,32], index: 0, kind: input, shape index: {}]
  %s1 = inlined_call_operand.vmem [shape: f32[2,8,1], index: 1, kind: input, shape index: {}]
  %s2 = inlined_call_operand.hbm [shape: f32[4,32,32], index: 2, kind: input, shape index: {}]
  %s3 = inlined_call_operand.vmem [shape: f32[1,32], index: 3, kind: input, shape index: {}]
  %s4 = inlined_call_operand.hbm [shape: f32[2,32], index: 4, kind: output, shape index: {}]
  %s5 = sld [smem:[#allocation0]]
  $region30: #{tpu_custom_call.1} parent=0
    _
  %s7 = ssub.s32 1, %s5
  %s8 = scalar_select 0, %s7, %s5
  $region1: #{tpu_custom_call.1} parent=0
    #allocation2 [shape = 'u8[65536]{0}', space=vmem, size = 0x10000, scoped, tag = 'input window, operand 2, single buffered']
    #allocation3 [shape = 's32[1]{0}', space=sflag, size = 0x4, scoped, tag = 'scoped memory for tpu_custom_call.1']
    #allocation4 [shape = 's32[1]{0}', space=sflag, size = 0x4, scoped, tag = 'scoped memory for tpu_custom_call.1']
    #allocation5 [shape = 'u8[1024]{0}', space=vmem, size = 0x400, scoped, tag = 'output window, operand 0, single buffered']
    %9 = vsyncpa [#allocation3], 0
    %10 = vsyncpa [#allocation4], 0
    // Predicated region
    $region2: #{tpu_custom_call.1} parent=1 // pred_check
      _
    $region3: #{tpu_custom_call.1} parent=1 // pred_check_branch
      %12 = sbr.rel (0) target = $region5
    $region4: #{tpu_custom_call.1} parent=1 // pred_region
      _
    $region5: #{tpu_custom_call.1} parent=1 // pred_fallthru
      _
    // Predicated region
    $region6: #{tpu_custom_call.1} parent=1 // pred_check
      _
    $region7: #{tpu_custom_call.1} parent=1 // pred_check_branch
      %14 = sbr.rel (0) target = $region9
    $region8: #{tpu_custom_call.1} parent=1 // pred_region
      _
    $region9: #{tpu_custom_call.1} parent=1 // pred_fallthru
      _
    // Predicated region
    $region10: #{tpu_custom_call.1} parent=1 // pred_check
      _
    $region11: #{tpu_custom_call.1} parent=1 // pred_check_branch
      %16 = sbr.rel (0) target = $region13
    $region12: #{tpu_custom_call.1} parent=1 // pred_region
      %s18 = ssub.s32 2048, 2048
      %19 = vsyncadd [#allocation3], %s18
      %s20 = sshll.u32 [#allocation2], 4
      %s21 = int_to_ptr.vmem [resolvable:$true] %s20
      %26 = dma.hbm_to_vmem [thread:$0]  %s2, 2048, %s21, [#allocation3], 128, 128, 8
    $region13: #{tpu_custom_call.1} parent=1 // pred_fallthru
      _
    // Predicated region
    $region14: #{tpu_custom_call.1} parent=1 // pred_check
      _
    $region15: #{tpu_custom_call.1} parent=1 // pred_check_branch
      %28 = sbr.rel (0) target = $region17
    $region16: #{tpu_custom_call.1} parent=1 // pred_region
      _
    $region17: #{tpu_custom_call.1} parent=1 // pred_fallthru
      _
    // Predicated region
    $region18: #{tpu_custom_call.1} parent=1 // pred_check
      _
    $region19: #{tpu_custom_call.1} parent=1 // pred_check_branch
      %30 = sbr.rel (0) target = $region21
    $region20: #{tpu_custom_call.1} parent=1 // pred_region
      %31 = dma.done [#allocation3], 2048
    $region21: #{tpu_custom_call.1} parent=1 // pred_fallthru
      _
    %v32 = vld [vmem:[%s0] sm:$0xff]
    %v33 = vld [vmem:[%s0 + $0x8] sm:$0xff]
    %v34 = vld [vmem:[%s1] sm:$0xff]
    %v35 = vld [vmem:[%s1 + $0x8] sm:$0xff]
    %vm36 = vcmask 7168
    %v37 = vsel %vm36, %v34, 0.0
    %v38 = vrot.slane %v37, 4
    %v39 = vadd.f32 %v37, %v38
    %v40 = vrot.slane %v39, 2
    %v41 = vadd.f32 %v39, %v40
    %v42 = vrot.slane %v41, 1
    %v43 = vadd.f32 %v41, %v42
    %v44 = vsel %vm36, %v35, 0.0
    %v45 = vrot.slane %v44, 4
    %v46 = vadd.f32 %v44, %v45
    %v47 = vrot.slane %v46, 2
    %v48 = vadd.f32 %v46, %v47
    %v49 = vrot.slane %v48, 1
    %v50 = vadd.f32 %v48, %v49
    %v51 = vrcp.pop %v43
    %v52 = vrcp.pop %v50
    %v53 = vsub.f32 1.0, %v34
    %v54 = vsub.f32 1.0, %v35
    %v55 = vmul.f32 %v53, 100000.0
    %v56 = vmul.f32 %v54, 100000.0
    %58 = vset.pattern.permute.xlu0 0
    %59 = vperm.xlu0 %58, %v34
    %v60 = vpop.permute.xlu0 %59
    %63 = vset.pattern.permute.xlu0 0
    %64 = vperm.xlu0 %63, %v35
    %v65 = vpop.permute.xlu0 %64
    %v67 = vmul.f32 %v32, %v60
    %v68 = vmul.f32 %v33, %v65
    %vm69 = vcmask 261120
    %v70 = vsel %vm69, %v32, 0.0
    %v71 = vrot.slane %v70, 4
    %v72 = vadd.f32 %v70, %v71
    %v73 = vrot.slane %v72, 2
    %v74 = vadd.f32 %v72, %v73
    %v75 = vrot.slane %v74, 1
    %v76 = vadd.f32 %v74, %v75
    %v77 = vsel %vm69, %v33, 0.0
    %v78 = vrot.slane %v77, 4
    %v79 = vadd.f32 %v77, %v78
    %v80 = vrot.slane %v79, 2
    %v81 = vadd.f32 %v79, %v80
    %v82 = vrot.slane %v81, 1
    %v83 = vadd.f32 %v81, %v82
    %v84 = vsel %vm69, %v67, 0.0
    %v85 = vrot.slane %v84, 4
    %v86 = vadd.f32 %v84, %v85
    %v87 = vrot.slane %v86, 2
    %v88 = vadd.f32 %v86, %v87
    %v89 = vrot.slane %v88, 1
    %v90 = vadd.f32 %v88, %v89
    %v91 = vsel %vm69, %v68, 0.0
    %v92 = vrot.slane %v91, 4
    %v93 = vadd.f32 %v91, %v92
    %v94 = vrot.slane %v93, 2
    %v95 = vadd.f32 %v93, %v94
    %v96 = vrot.slane %v95, 1
    %v97 = vadd.f32 %v95, %v96
    %v98 = vmul.f32 %v67, %v32
    %v99 = vmul.f32 %v68, %v33
    %v100 = vsel %vm69, %v98, 0.0
    %v101 = vrot.slane %v100, 4
    %v102 = vadd.f32 %v100, %v101
    %v103 = vrot.slane %v102, 2
    %v104 = vadd.f32 %v102, %v103
    %v105 = vrot.slane %v104, 1
    %v106 = vadd.f32 %v104, %v105
    %v107 = vsel %vm69, %v99, 0.0
    %v108 = vrot.slane %v107, 4
    %v109 = vadd.f32 %v107, %v108
    %v110 = vrot.slane %v109, 2
    %v111 = vadd.f32 %v109, %v110
    %v112 = vrot.slane %v111, 1
    %v113 = vadd.f32 %v111, %v112
    %115 = vset.pattern.permute.xlu0 0
    %116 = vperm.xlu0 %115, %v55
    %v117 = vpop.permute.xlu0 %116
    %120 = vset.pattern.permute.xlu0 0
    %121 = vperm.xlu0 %120, %v56
    %v122 = vpop.permute.xlu0 %121
    %v124 = vadd.f32 %v32, %v117
    %v125 = vadd.f32 %v33, %v122
    %v126 = vsel %vm69, %v124, inf
    %v127 = vrot.slane %v126, 4
    %v128 = vmin.f32 %v126, %v127
    %v129 = vrot.slane %v128, 2
    %v130 = vmin.f32 %v128, %v129
    %v131 = vrot.slane %v130, 1
    %v132 = vmin.f32 %v130, %v131
    %v133 = vsel %vm69, %v125, inf
    %v134 = vrot.slane %v133, 4
    %v135 = vmin.f32 %v133, %v134
    %v136 = vrot.slane %v135, 2
    %v137 = vmin.f32 %v135, %v136
    %v138 = vrot.slane %v137, 1
    %v139 = vmin.f32 %v137, %v138
    %v140 = vsub.f32 %v32, %v117
    %v141 = vsub.f32 %v33, %v122
    %v142 = vsel %vm69, %v140, -inf
    %v143 = vrot.slane %v142, 4
    %v144 = vmax.f32 %v142, %v143
    %v145 = vrot.slane %v144, 2
    %v146 = vmax.f32 %v144, %v145
    %v147 = vrot.slane %v146, 1
    %v148 = vmax.f32 %v146, %v147
    %v149 = vsel %vm69, %v141, -inf
    %v150 = vrot.slane %v149, 4
    %v151 = vmax.f32 %v149, %v150
    %v152 = vrot.slane %v151, 2
    %v153 = vmax.f32 %v151, %v152
    %v154 = vrot.slane %v153, 1
    %v155 = vmax.f32 %v153, %v154
    %157 = vset.pattern.permute.xlu0 0
    %158 = vperm.xlu0 %157, %v51
    %v159 = vpop.permute.xlu0 %158
    %162 = vset.pattern.permute.xlu0 0
    %163 = vperm.xlu0 %162, %v52
    %v164 = vpop.permute.xlu0 %163
    %v166 = vmul.f32 %v76, %v159
    %v167 = vmul.f32 %v83, %v164
    %v168 = vmul.f32 %v166, 2.0
    %v169 = vmul.f32 %v167, 2.0
    %v170 = vmul.f32 %v168, %v90
    %v171 = vmul.f32 %v169, %v97
    %v172 = vsub.f32 %v106, %v170
    %v173 = vsub.f32 %v113, %v171
    %v174 = vmul.f32 %v172, %v159
    %v175 = vmul.f32 %v173, %v164
    %v176 = vmul.f32 %v166, %v166
    %v177 = vmul.f32 %v167, %v167
    %v178 = vadd.f32 %v174, %v176
    %v179 = vadd.f32 %v175, %v177
    %v180 = vld [vmem:[#allocation2] sm:$0xff]
    %v181 = vld [vmem:[#allocation2 + $0x8] sm:$0xff]
    %v182 = vld [vmem:[#allocation2 + $0x10] sm:$0xff]
    %v183 = vld [vmem:[#allocation2 + $0x18] sm:$0xff]
    %s184 = scalar_lea.vmem [#allocation2], 32
    %v185 = vld [vmem:[%s184] sm:$0xff]
    %v186 = vld [vmem:[%s184 + $0x8] sm:$0xff]
    %v187 = vld [vmem:[%s184 + $0x10] sm:$0xff]
    %v188 = vld [vmem:[%s184 + $0x18] sm:$0xff]
    %vm191 = vcmask 1041409
    %v192 = vsel %vm191, %v139, %v132
    %v193 = vsel %vm69, %v192, 0
    %195 = vmatprep.subr.mxu0 0.0
    %196 = vmatpush1.msra.mxu0 %v185
    %197 = vmatprep.subr.mxu0 0.0
    %198 = vmatpush1.msra.mxu0 %v186
    %199 = vmatprep.subr.mxu0 0.0
    %200 = vmatpush1.msra.mxu0 %v187
    %201 = vmatprep.subr.mxu0 0.0
    %202 = vmatpush1.msra.mxu0 %v188
    %203 = vmatprep.subr.mxu0 0.0
    %204 = vmatpush1.msra.mxu0 0.0
    %205 = vmatprep.subr.mxu0 0.0
    %206 = vmatpush1.msra.mxu0 0.0
    %207 = vmatprep.subr.mxu0 0.0
    %208 = vmatpush1.msra.mxu0 0.0
    %209 = vmatprep.subr.mxu0 0.0
    %210 = vmatpush1.msra.mxu0 0.0
    %211 = vmatprep.subr.mxu0 0.0
    %212 = vmatpush1.msra.mxu0 0.0
    %213 = vmatprep.subr.mxu0 0.0
    %214 = vmatpush1.msra.mxu0 0.0
    %215 = vmatprep.subr.mxu0 0.0
    %216 = vmatpush1.msra.mxu0 0.0
    %217 = vmatprep.subr.mxu0 0.0
    %218 = vmatpush1.msra.mxu0 0.0
    %219 = vmatprep.subr.mxu0 0.0
    %220 = vmatpush1.msra.mxu0 0.0
    %221 = vmatprep.subr.mxu0 0.0
    %222 = vmatpush1.msra.mxu0 0.0
    %223 = vmatprep.subr.mxu0 0.0
    %224 = vmatpush1.msra.mxu0 0.0
    %225 = vmatprep.subr.mxu0 0.0
    %226 = vmatpush1.msra.mxu0 0.0
    %227 = vmatprep.subr.mxu0 0.0
    %228 = vmatpush1.msra.mxu0 0.0
    %229 = vmatprep.subr.mxu0 0.0
    %230 = vmatpush1.msra.mxu0 0.0
    %231 = vmatprep.subr.mxu0 0.0
    %232 = vmatpush1.msra.mxu0 0.0
    %233 = vmatprep.subr.mxu0 0.0
    %234 = vmatpush1.msra.mxu0 0.0
    %235 = vmatprep.subr.mxu0 0.0
    %236 = vmatpush1.msra.mxu0 0.0
    %237 = vmatprep.subr.mxu0 0.0
    %238 = vmatpush1.msra.mxu0 0.0
    %239 = vmatprep.subr.mxu0 0.0
    %240 = vmatpush1.msra.mxu0 0.0
    %241 = vmatprep.subr.mxu0 0.0
    %242 = vmatpush1.msra.mxu0 0.0
    %243 = vmatprep.subr.mxu0 0.0
    %244 = vmatpush1.msra.mxu0 0.0
    %245 = vmatprep.subr.mxu0 0.0
    %246 = vmatpush1.msra.mxu0 0.0
    %247 = vmatprep.subr.mxu0 0.0
    %248 = vmatpush1.msra.mxu0 0.0
    %249 = vmatprep.subr.mxu0 0.0
    %250 = vmatpush1.msra.mxu0 0.0
    %251 = vmatprep.subr.mxu0 0.0
    %252 = vmatpush1.msra.mxu0 0.0
    %253 = vmatprep.subr.mxu0 0.0
    %254 = vmatpush1.msra.mxu0 0.0
    %255 = vmatprep.subr.mxu0 0.0
    %256 = vmatpush1.msra.mxu0 0.0
    %257 = vmatprep.subr.mxu0 0.0
    %258 = vmatpush1.msra.mxu0 0.0
    %259 = vmatprep.mubr.f32.mxu0 0.0
    %260 = vmatmul.mubr.f32.gmra.mrb[0].mxu0 %v193
    %v261 = vpop.f32.mrb[0].mxu0
    %v262 = vadd.f32 0.0, %v261
    %v263 = vpop.f32.mrb[0].mxu0
    %264 = vdwg.mxu0
    %v267 = vsel %vm191, %v167, %v166
    %v268 = vsel %vm69, %v267, 0
    %270 = vmatprep.subr.mxu0 0.0
    %271 = vmatpush1.msra.mxu0 %v180
    %272 = vmatprep.subr.mxu0 0.0
    %273 = vmatpush1.msra.mxu0 %v181
    %274 = vmatprep.subr.mxu0 0.0
    %275 = vmatpush1.msra.mxu0 %v182
    %276 = vmatprep.subr.mxu0 0.0
    %277 = vmatpush1.msra.mxu0 %v183
    %278 = vmatprep.subr.mxu0 0.0
    %279 = vmatpush1.msra.mxu0 0.0
    %280 = vmatprep.subr.mxu0 0.0
    %281 = vmatpush1.msra.mxu0 0.0
    %282 = vmatprep.subr.mxu0 0.0
    %283 = vmatpush1.msra.mxu0 0.0
    %284 = vmatprep.subr.mxu0 0.0
    %285 = vmatpush1.msra.mxu0 0.0
    %286 = vmatprep.subr.mxu0 0.0
    %287 = vmatpush1.msra.mxu0 0.0
    %288 = vmatprep.subr.mxu0 0.0
    %289 = vmatpush1.msra.mxu0 0.0
    %290 = vmatprep.subr.mxu0 0.0
    %291 = vmatpush1.msra.mxu0 0.0
    %292 = vmatprep.subr.mxu0 0.0
    %293 = vmatpush1.msra.mxu0 0.0
    %294 = vmatprep.subr.mxu0 0.0
    %295 = vmatpush1.msra.mxu0 0.0
    %296 = vmatprep.subr.mxu0 0.0
    %297 = vmatpush1.msra.mxu0 0.0
    %298 = vmatprep.subr.mxu0 0.0
    %299 = vmatpush1.msra.mxu0 0.0
    %300 = vmatprep.subr.mxu0 0.0
    %301 = vmatpush1.msra.mxu0 0.0
    %302 = vmatprep.subr.mxu0 0.0
    %303 = vmatpush1.msra.mxu0 0.0
    %304 = vmatprep.subr.mxu0 0.0
    %305 = vmatpush1.msra.mxu0 0.0
    %306 = vmatprep.subr.mxu0 0.0
    %307 = vmatpush1.msra.mxu0 0.0
    %308 = vmatprep.subr.mxu0 0.0
    %309 = vmatpush1.msra.mxu0 0.0
    %310 = vmatprep.subr.mxu0 0.0
    %311 = vmatpush1.msra.mxu0 0.0
    %312 = vmatprep.subr.mxu0 0.0
    %313 = vmatpush1.msra.mxu0 0.0
    %314 = vmatprep.subr.mxu0 0.0
    %315 = vmatpush1.msra.mxu0 0.0
    %316 = vmatprep.subr.mxu0 0.0
    %317 = vmatpush1.msra.mxu0 0.0
    %318 = vmatprep.subr.mxu0 0.0
    %319 = vmatpush1.msra.mxu0 0.0
    %320 = vmatprep.subr.mxu0 0.0
    %321 = vmatpush1.msra.mxu0 0.0
    %322 = vmatprep.subr.mxu0 0.0
    %323 = vmatpush1.msra.mxu0 0.0
    %324 = vmatprep.subr.mxu0 0.0
    %325 = vmatpush1.msra.mxu0 0.0
    %326 = vmatprep.subr.mxu0 0.0
    %327 = vmatpush1.msra.mxu0 0.0
    %328 = vmatprep.subr.mxu0 0.0
    %329 = vmatpush1.msra.mxu0 0.0
    %330 = vmatprep.subr.mxu0 0.0
    %331 = vmatpush1.msra.mxu0 0.0
    %332 = vmatprep.subr.mxu0 0.0
    %333 = vmatpush1.msra.mxu0 0.0
    %334 = vmatprep.mubr.f32.mxu0 0.0
    %335 = vmatmul.mubr.f32.gmra.mrb[0].mxu0 %v268
    %v336 = vpop.f32.mrb[0].mxu0
    %v337 = vadd.f32 %v262, %v336
    %v338 = vpop.f32.mrb[0].mxu0
    %339 = vdwg.mxu0
    %s340 = scalar_lea.vmem [#allocation2], 64
    %v341 = vld [vmem:[%s340] sm:$0xff]
    %v342 = vld [vmem:[%s340 + $0x8] sm:$0xff]
    %v343 = vld [vmem:[%s340 + $0x10] sm:$0xff]
    %v344 = vld [vmem:[%s340 + $0x18] sm:$0xff]
    %v347 = vsel %vm191, %v155, %v148
    %v348 = vsel %vm69, %v347, 0
    %350 = vmatprep.subr.mxu0 0.0
    %351 = vmatpush1.msra.mxu0 %v341
    %352 = vmatprep.subr.mxu0 0.0
    %353 = vmatpush1.msra.mxu0 %v342
    %354 = vmatprep.subr.mxu0 0.0
    %355 = vmatpush1.msra.mxu0 %v343
    %356 = vmatprep.subr.mxu0 0.0
    %357 = vmatpush1.msra.mxu0 %v344
    %358 = vmatprep.subr.mxu0 0.0
    %359 = vmatpush1.msra.mxu0 0.0
    %360 = vmatprep.subr.mxu0 0.0
    %361 = vmatpush1.msra.mxu0 0.0
    %362 = vmatprep.subr.mxu0 0.0
    %363 = vmatpush1.msra.mxu0 0.0
    %364 = vmatprep.subr.mxu0 0.0
    %365 = vmatpush1.msra.mxu0 0.0
    %366 = vmatprep.subr.mxu0 0.0
    %367 = vmatpush1.msra.mxu0 0.0
    %368 = vmatprep.subr.mxu0 0.0
    %369 = vmatpush1.msra.mxu0 0.0
    %370 = vmatprep.subr.mxu0 0.0
    %371 = vmatpush1.msra.mxu0 0.0
    %372 = vmatprep.subr.mxu0 0.0
    %373 = vmatpush1.msra.mxu0 0.0
    %374 = vmatprep.subr.mxu0 0.0
    %375 = vmatpush1.msra.mxu0 0.0
    %376 = vmatprep.subr.mxu0 0.0
    %377 = vmatpush1.msra.mxu0 0.0
    %378 = vmatprep.subr.mxu0 0.0
    %379 = vmatpush1.msra.mxu0 0.0
    %380 = vmatprep.subr.mxu0 0.0
    %381 = vmatpush1.msra.mxu0 0.0
    %382 = vmatprep.subr.mxu0 0.0
    %383 = vmatpush1.msra.mxu0 0.0
    %384 = vmatprep.subr.mxu0 0.0
    %385 = vmatpush1.msra.mxu0 0.0
    %386 = vmatprep.subr.mxu0 0.0
    %387 = vmatpush1.msra.mxu0 0.0
    %388 = vmatprep.subr.mxu0 0.0
    %389 = vmatpush1.msra.mxu0 0.0
    %390 = vmatprep.subr.mxu0 0.0
    %391 = vmatpush1.msra.mxu0 0.0
    %392 = vmatprep.subr.mxu0 0.0
    %393 = vmatpush1.msra.mxu0 0.0
    %394 = vmatprep.subr.mxu0 0.0
    %395 = vmatpush1.msra.mxu0 0.0
    %396 = vmatprep.subr.mxu0 0.0
    %397 = vmatpush1.msra.mxu0 0.0
    %398 = vmatprep.subr.mxu0 0.0
    %399 = vmatpush1.msra.mxu0 0.0
    %400 = vmatprep.subr.mxu0 0.0
    %401 = vmatpush1.msra.mxu0 0.0
    %402 = vmatprep.subr.mxu0 0.0
    %403 = vmatpush1.msra.mxu0 0.0
    %404 = vmatprep.subr.mxu0 0.0
    %405 = vmatpush1.msra.mxu0 0.0
    %406 = vmatprep.subr.mxu0 0.0
    %407 = vmatpush1.msra.mxu0 0.0
    %408 = vmatprep.subr.mxu0 0.0
    %409 = vmatpush1.msra.mxu0 0.0
    %410 = vmatprep.subr.mxu0 0.0
    %411 = vmatpush1.msra.mxu0 0.0
    %412 = vmatprep.subr.mxu0 0.0
    %413 = vmatpush1.msra.mxu0 0.0
    %414 = vmatprep.mubr.f32.mxu0 0.0
    %415 = vmatmul.mubr.f32.gmra.mrb[0].mxu0 %v348
    %v416 = vpop.f32.mrb[0].mxu0
    %v417 = vadd.f32 0.0, %v416
    %v418 = vpop.f32.mrb[0].mxu0
    %419 = vdwg.mxu0
    %v420 = vadd.f32 %v337, %v417
    %s421 = scalar_lea.vmem [#allocation2], 96
    %v422 = vld [vmem:[%s421] sm:$0xff]
    %v423 = vld [vmem:[%s421 + $0x8] sm:$0xff]
    %v424 = vld [vmem:[%s421 + $0x10] sm:$0xff]
    %v425 = vld [vmem:[%s421 + $0x18] sm:$0xff]
    %v428 = vsel %vm191, %v179, %v178
    %v429 = vsel %vm69, %v428, 0
    %431 = vmatprep.subr.mxu0 0.0
    %432 = vmatpush1.msra.mxu0 %v422
    %433 = vmatprep.subr.mxu0 0.0
    %434 = vmatpush1.msra.mxu0 %v423
    %435 = vmatprep.subr.mxu0 0.0
    %436 = vmatpush1.msra.mxu0 %v424
    %437 = vmatprep.subr.mxu0 0.0
    %438 = vmatpush1.msra.mxu0 %v425
    %439 = vmatprep.subr.mxu0 0.0
    %440 = vmatpush1.msra.mxu0 0.0
    %441 = vmatprep.subr.mxu0 0.0
    %442 = vmatpush1.msra.mxu0 0.0
    %443 = vmatprep.subr.mxu0 0.0
    %444 = vmatpush1.msra.mxu0 0.0
    %445 = vmatprep.subr.mxu0 0.0
    %446 = vmatpush1.msra.mxu0 0.0
    %447 = vmatprep.subr.mxu0 0.0
    %448 = vmatpush1.msra.mxu0 0.0
    %449 = vmatprep.subr.mxu0 0.0
    %450 = vmatpush1.msra.mxu0 0.0
    %451 = vmatprep.subr.mxu0 0.0
    %452 = vmatpush1.msra.mxu0 0.0
    %453 = vmatprep.subr.mxu0 0.0
    %454 = vmatpush1.msra.mxu0 0.0
    %455 = vmatprep.subr.mxu0 0.0
    %456 = vmatpush1.msra.mxu0 0.0
    %457 = vmatprep.subr.mxu0 0.0
    %458 = vmatpush1.msra.mxu0 0.0
    %459 = vmatprep.subr.mxu0 0.0
    %460 = vmatpush1.msra.mxu0 0.0
    %461 = vmatprep.subr.mxu0 0.0
    %462 = vmatpush1.msra.mxu0 0.0
    %463 = vmatprep.subr.mxu0 0.0
    %464 = vmatpush1.msra.mxu0 0.0
    %465 = vmatprep.subr.mxu0 0.0
    %466 = vmatpush1.msra.mxu0 0.0
    %467 = vmatprep.subr.mxu0 0.0
    %468 = vmatpush1.msra.mxu0 0.0
    %469 = vmatprep.subr.mxu0 0.0
    %470 = vmatpush1.msra.mxu0 0.0
    %471 = vmatprep.subr.mxu0 0.0
    %472 = vmatpush1.msra.mxu0 0.0
    %473 = vmatprep.subr.mxu0 0.0
    %474 = vmatpush1.msra.mxu0 0.0
    %475 = vmatprep.subr.mxu0 0.0
    %476 = vmatpush1.msra.mxu0 0.0
    %477 = vmatprep.subr.mxu0 0.0
    %478 = vmatpush1.msra.mxu0 0.0
    %479 = vmatprep.subr.mxu0 0.0
    %480 = vmatpush1.msra.mxu0 0.0
    %481 = vmatprep.subr.mxu0 0.0
    %482 = vmatpush1.msra.mxu0 0.0
    %483 = vmatprep.subr.mxu0 0.0
    %484 = vmatpush1.msra.mxu0 0.0
    %485 = vmatprep.subr.mxu0 0.0
    %486 = vmatpush1.msra.mxu0 0.0
    %487 = vmatprep.subr.mxu0 0.0
    %488 = vmatpush1.msra.mxu0 0.0
    %489 = vmatprep.subr.mxu0 0.0
    %490 = vmatpush1.msra.mxu0 0.0
    %491 = vmatprep.subr.mxu0 0.0
    %492 = vmatpush1.msra.mxu0 0.0
    %493 = vmatprep.subr.mxu0 0.0
    %494 = vmatpush1.msra.mxu0 0.0
    %495 = vmatprep.mubr.f32.mxu0 0.0
    %496 = vmatmul.mubr.f32.gmra.mrb[0].mxu0 %v429
    %v497 = vpop.f32.mrb[0].mxu0
    %v498 = vadd.f32 0.0, %v497
    %v499 = vpop.f32.mrb[0].mxu0
    %500 = vdwg.mxu0
    %v501 = vadd.f32 %v420, %v498
    %v502 = vld [vmem:[%s3] sm:$0x1]
    %v504 = vlaneseq
    %v505 = vshrl.u32 %v504, 7
    %v506 = vsub.s32 0, %v505
    %v507 = vrot.slane %v502, %v506
    %v509 = vadd.f32 %v501, %v507
    %vm510 = vcmask 254976
    %511 = vst.msk [vmem:[#allocation5] sm:$0x3] %vm510, %v509
    // Predicated region
    $region22: #{tpu_custom_call.1} parent=1 // pred_check
      _
    $region23: #{tpu_custom_call.1} parent=1 // pred_check_branch
      %513 = sbr.rel (0) target = $region25
    $region24: #{tpu_custom_call.1} parent=1 // pred_region
      %s515 = ssub.s32 32, 32
      %516 = vsyncadd [#allocation4], %s515
      %s518 = sshll.u32 [#allocation5], 4
      %s519 = int_to_ptr.vmem [resolvable:$true] %s518
      %521 = dma.vmem_to_hbm [thread:$0]  %s519, 32, %s4, [#allocation4]
    $region25: #{tpu_custom_call.1} parent=1 // pred_fallthru
      _
    // Predicated region
    $region26: #{tpu_custom_call.1} parent=1 // pred_check
      _
    $region27: #{tpu_custom_call.1} parent=1 // pred_check_branch
      %523 = sbr.rel (0) target = $region29
    $region28: #{tpu_custom_call.1} parent=1 // pred_region
      %524 = dma.done [#allocation4], 32
    $region29: #{tpu_custom_call.1} parent=1 // pred_fallthru
      _
    %525 = vsyncpa [#allocation3], 1
    %526 = vsyncpa [#allocation4], 1

</llo_original>
